<compile_context>
chip_gen: v6e
topology: v6e:2x2x1
jax: 0.10.0
libtpu: 0.0.40
codegen_flags: <defaults>
</compile_context>

<pallas_src>
import functools

import jax
import jax.numpy as jnp
from jax import lax
from jax.experimental import pallas as pl
from jax.experimental.pallas import tpu as pltpu


def _fcn_kernel(x_ref, w1_ref, b1_ref, wh_ref, bh_ref, we_ref, be_ref, o_ref,
                *, n_hidden_blocks, n_in, out_reduce, tm_inner, n_chunks):
    """Full MLP forward for one batch slab, processed in 256-lane chunks.

    Transposed layout (batch on the lane axis):
      x_ref : (N_IN, TM_OUTER)
      w1_ref: (H, N_IN)            b1_ref: (H, 1)
      wh_ref: (LB, H, H)           bh_ref: (LB, H, 1)   (torch (out, in) layout)
      we_ref: (H, 1) if out_reduce else (N_OUT, H)
      be_ref: (N_OUT, 1)
      o_ref : (N_OUT, TM_OUTER)
    """
    # Tiny, grid-invariant operands: hoist the loads out of the chunk loop.
    w1 = w1_ref[...]
    b1 = b1_ref[...]
    we = we_ref[...]
    be = be_ref[...]

    def chunk(off):
        x = x_ref[:, pl.ds(off, tm_inner)]                    # (N_IN, TM_IN)

        if n_in == 1:
            # K=1 matmul is an outer product -> VPU broadcast multiply-add.
            h = jnp.tanh(w1 * x + b1)                          # (H, TM_IN)
        else:
            h = jnp.tanh(
                jnp.dot(w1, x, preferred_element_type=jnp.float32) + b1)

        if n_hidden_blocks <= 4:
            # Shallow net: static unroll (small, bounded working set).
            for i in range(n_hidden_blocks):
                h = jnp.tanh(
                    jnp.dot(wh_ref[i], h, preferred_element_type=jnp.float32)
                    + bh_ref[i])
        else:
            # Deep net: fori_loop bounds the live range to one layer at a time.
            def layer(i, hh):
                return jnp.tanh(
                    jnp.dot(wh_ref[i], hh, preferred_element_type=jnp.float32)
                    + bh_ref[i])
            h = lax.fori_loop(0, n_hidden_blocks, layer, h)

        if out_reduce:
            # N_OUT == 1: VPU multiply + sublane reduce (XLU) instead of a
            # 1-row MXU matmul.  we is the (H, 1) column of the output layer.
            out = jnp.sum(we * h, axis=0, keepdims=True) + be  # (1, TM_IN)
        else:
            out = jnp.dot(we, h, preferred_element_type=jnp.float32) + be

        o_ref[:, pl.ds(off, tm_inner)] = out.astype(o_ref.dtype)

    if n_chunks == 1:
        chunk(0)
    else:
        @pl.loop(0, n_chunks)
        def _(j):
            chunk(pl.multiple_of(j * tm_inner, tm_inner))


def _pick_tiling(batch, max_outer):
    """Choose (tm_inner, padded_batch, chunks_per_step, grid_steps).

    tm_inner: 256-lane sub-chunk (128 for tiny batches) — activation stays at
    <= 8 vregs.  The outer slab is the largest multiple of tm_inner that (a)
    divides the padded batch, (b) is <= max_outer, and (c) leaves >= 2 grid
    steps whenever possible (v7x megacore)."""
    tm_inner = 128 if batch <= 128 else 256
    b_pad = ((batch + tm_inner - 1) // tm_inner) * tm_inner
    n_chunks_total = b_pad // tm_inner
    max_cps = max(max_outer // tm_inner, 1)
    cps = 1
    for c in range(1, max_cps + 1):
        if n_chunks_total % c == 0 and n_chunks_total // c >= 2:
            cps = c
    return tm_inner, b_pad, cps, n_chunks_total // cps


def fcn_forward(x, params, *, max_outer=8192):
    """Run the FCN forward pass with a Pallas TPU kernel.

    x: (B, N_IN) float32.
    params (torch layout): w1 (H, N_IN), b1 (H, 1), wh (L-1, H, H),
                           bh (L-1, H, 1), we (N_OUT, H), be (N_OUT, 1).
    Returns: (B, N_OUT) float32.
    """
    w1, b1 = params["w1"], params["b1"]
    wh, bh = params["wh"], params["bh"]
    we, be = params["we"], params["be"]

    B, n_in = x.shape
    n_hid = w1.shape[0]
    n_out = we.shape[0]
    n_hidden_blocks = wh.shape[0]

    # Degenerate N_LAYERS == 1 case: dummy (never-read) hidden block keeps all
    # operand shapes non-empty.
    if n_hidden_blocks == 0:
        wh = jnp.zeros((1, n_hid, n_hid), jnp.float32)
        bh = jnp.zeros((1, n_hid, 1), jnp.float32)
    wh_blocks = wh.shape[0]

    tm_inner, b_pad, cps, grid_steps = _pick_tiling(B, max_outer)
    tm_outer = cps * tm_inner

    # Batch on the lane axis.  For N_IN == 1 this is a pure reshape (identical
    # data order), so no XLA relayout pass is emitted.
    xt = jnp.reshape(x, (1, B)) if n_in == 1 else x.T
    if b_pad != B:
        xt = jnp.pad(xt, ((0, 0), (0, b_pad - B)))

    out_reduce = (n_out == 1)
    we_k = we.T if out_reduce else we       # (H, 1) column vs (N_OUT, H)

    kernel = functools.partial(
        _fcn_kernel, n_hidden_blocks=n_hidden_blocks, n_in=n_in,
        out_reduce=out_reduce, tm_inner=tm_inner, n_chunks=cps)

    # Deeper input pipelining only pays off when there are enough grid steps.
    x_pipe = pl.Buffered(3) if grid_steps >= 3 else None

    cost = pl.CostEstimate(
        flops=int(2 * b_pad * n_hid * (n_in + n_hidden_blocks * n_hid + n_out)),
        transcendentals=int(b_pad * n_hid * (1 + n_hidden_blocks)),
        bytes_accessed=int(4 * (b_pad * (n_in + n_out) + w1.size + b1.size
                                + wh.size + bh.size + we.size + be.size)),
    )

    out_t = pl.pallas_call(
        kernel,
        out_shape=jax.ShapeDtypeStruct((n_out, b_pad), jnp.float32),
        grid_spec=pltpu.PrefetchScalarGridSpec(
            num_scalar_prefetch=0,
            grid=(grid_steps,),
            in_specs=[
                # x: streamed over the batch (lane) axis.
                pl.BlockSpec((n_in, tm_outer), lambda i: (0, i),
                             pipeline_mode=x_pipe),
                # weights/biases: full arrays, resident across all grid steps.
                pl.BlockSpec((n_hid, n_in), lambda i: (0, 0)),
                pl.BlockSpec((n_hid, 1), lambda i: (0, 0)),
                pl.BlockSpec((wh_blocks, n_hid, n_hid), lambda i: (0, 0, 0)),
                pl.BlockSpec((wh_blocks, n_hid, 1), lambda i: (0, 0, 0)),
                pl.BlockSpec(we_k.shape, lambda i: (0, 0)),
                pl.BlockSpec((n_out, 1), lambda i: (0, 0)),
            ],
            out_specs=pl.BlockSpec((n_out, tm_outer), lambda i: (0, i)),
        ),
        compiler_params=pltpu.CompilerParams(
            dimension_semantics=("parallel",),
        ),
        cost_estimate=cost,
    )(xt, w1, b1, wh, bh, we_k, be)

    out_t = out_t[:, :B]
    # For N_OUT == 1 the (1, B) -> (B, 1) step is again a pure reshape.
    return jnp.reshape(out_t, (B, n_out)) if n_out == 1 else out_t.T


def init_fcn_params(key, n_input, n_output, n_hidden, n_layers):
    """Deterministic parameter init mirroring nn.Linear shapes (torch layout:
    weights (out_features, in_features), biases stored as column vectors)."""
    ks = jax.random.split(key, 6)
    scale_in = 1.0 / jnp.sqrt(jnp.float32(n_input))
    scale_h = 1.0 / jnp.sqrt(jnp.float32(n_hidden))

    w1 = jax.random.uniform(ks[0], (n_hidden, n_input), jnp.float32,
                            -scale_in, scale_in)
    b1 = jax.random.uniform(ks[1], (n_hidden, 1), jnp.float32,
                            -scale_in, scale_in)

    n_hb = n_layers - 1
    wh = jax.random.uniform(ks[2], (max(n_hb, 1), n_hidden, n_hidden),
                            jnp.float32, -scale_h, scale_h)[:n_hb]
    bh = jax.random.uniform(ks[3], (max(n_hb, 1), n_hidden, 1),
                            jnp.float32, -scale_h, scale_h)[:n_hb]

    we = jax.random.uniform(ks[4], (n_output, n_hidden), jnp.float32,
                            -scale_h, scale_h)
    be = jax.random.uniform(ks[5], (n_output, 1), jnp.float32,
                            -scale_h, scale_h)
    return {"w1": w1, "b1": b1, "wh": wh, "bh": bh, "we": we, "be": be}


def fcn_reference(x, params):
    """Pure-JAX reference (torch semantics: y = x @ W.T + b)."""
    h = jnp.tanh(x @ params["w1"].T + params["b1"][:, 0])
    for i in range(params["wh"].shape[0]):
        h = jnp.tanh(h @ params["wh"][i].T + params["bh"][i, :, 0])
    return h @ params["we"].T + params["be"][:, 0]


if __name__ == "__main__":
    # Shapes consistent with the 1D-well PINN: x.view(-1, 1) -> N_INPUT=1.
    N_INPUT, N_OUTPUT, N_HIDDEN, N_LAYERS = 1, 1, 32, 3

    key = jax.random.PRNGKey(0)
    pkey, pkey_deep, k1, k2, k3, k4, k5 = jax.random.split(key, 7)
    params = init_fcn_params(pkey, N_INPUT, N_OUTPUT, N_HIDDEN, N_LAYERS)

    def check(xkey, batch, prms, **kw):
        xv = jax.random.uniform(xkey, (batch, N_INPUT), jnp.float32)
        out = jax.block_until_ready(fcn_forward(xv, prms, **kw))
        ref = fcn_reference(xv, prms)
        assert out.shape == (batch, N_OUTPUT), out.shape
        err = jnp.max(jnp.abs(out - ref))
        assert jnp.allclose(out, ref, atol=5e-5, rtol=1e-5), (
            f"mismatch (B={batch}): max abs err {err}")

    # 1) 128-multiple batch, single grid step / single inner chunk.
    check(k1, 256, params)
    # 2) tiny non-128-multiple batch -> padded to 128, grid of 1.
    check(k2, 16, params)
    # 3) non-128-multiple batch -> pad to 1024: 2 grid steps x 2 inner chunks.
    check(k3, 1000, params)
    # 4) >=3 grid steps (exercises Buffered(3) + 4-chunk inner loop).
    check(k4, 3072, params, max_outer=1024)
    # 5) deeper net (5 hidden blocks) -> fori_loop hidden-layer path.
    params_deep = init_fcn_params(pkey_deep, N_INPUT, N_OUTPUT, N_HIDDEN, 6)
    check(k5, 512, params_deep)

    print("KERNEL_OK")
</pallas_src>

<mosaic_0001>
module attributes {stable_mosaic.version = 11 : i64} {
  func.func @_fcn_kernel(%arg0: i32, %arg1: memref<1x256xf32, #tpu.memory_space<vmem>>, %arg2: memref<32x1xf32, #tpu.memory_space<vmem>>, %arg3: memref<32x1xf32, #tpu.memory_space<vmem>>, %arg4: memref<2x32x32xf32, #tpu.memory_space<vmem>>, %arg5: memref<2x32x1xf32, #tpu.memory_space<vmem>>, %arg6: memref<32x1xf32, #tpu.memory_space<vmem>>, %arg7: memref<1x1xf32, #tpu.memory_space<vmem>>, %arg8: memref<1x256xf32, #tpu.memory_space<vmem>>) attributes {dimension_semantics = [#tpu.dimension_semantics<parallel>], iteration_bounds = array<i64: 1>, scalar_prefetch = 0 : i64, scratch_operands = 0 : i64, tpu.core_type = #tpu.core_type<tc>, window_params = [{transform_indices = @transform_0, window_bounds = array<i64: 1, 256>}, {pipeline_mode = #tpu.pipeline_mode<synchronous>, transform_indices = @transform_1, window_bounds = array<i64: 32, 1>}, {pipeline_mode = #tpu.pipeline_mode<synchronous>, transform_indices = @transform_2, window_bounds = array<i64: 32, 1>}, {pipeline_mode = #tpu.pipeline_mode<synchronous>, transform_indices = @transform_3, window_bounds = array<i64: 2, 32, 32>}, {pipeline_mode = #tpu.pipeline_mode<synchronous>, transform_indices = @transform_4, window_bounds = array<i64: 2, 32, 1>}, {pipeline_mode = #tpu.pipeline_mode<synchronous>, transform_indices = @transform_5, window_bounds = array<i64: 32, 1>}, {pipeline_mode = #tpu.pipeline_mode<synchronous>, transform_indices = @transform_6, window_bounds = array<i64: 1, 1>}, {transform_indices = @transform_7, window_bounds = array<i64: 1, 256>}]} {
    %c0 = arith.constant 0 : index
    %c0_0 = arith.constant 0 : index
    %0 = vector.load %arg2[%c0, %c0_0] : memref<32x1xf32, #tpu.memory_space<vmem>>, vector<32x1xf32>
    %c0_1 = arith.constant 0 : index
    %c0_2 = arith.constant 0 : index
    %1 = vector.load %arg3[%c0_1, %c0_2] : memref<32x1xf32, #tpu.memory_space<vmem>>, vector<32x1xf32>
    %c0_3 = arith.constant 0 : index
    %c0_4 = arith.constant 0 : index
    %2 = vector.load %arg6[%c0_3, %c0_4] : memref<32x1xf32, #tpu.memory_space<vmem>>, vector<32x1xf32>
    %c0_5 = arith.constant 0 : index
    %c0_6 = arith.constant 0 : index
    %3 = vector.load %arg7[%c0_5, %c0_6] : memref<1x1xf32, #tpu.memory_space<vmem>>, vector<1x1xf32>
    %c0_7 = arith.constant 0 : index
    %c0_8 = arith.constant 0 : index
    %4 = vector.load %arg1[%c0_7, %c0_8] : memref<1x256xf32, #tpu.memory_space<vmem>>, vector<1x256xf32>
    %5 = vector.broadcast %0 : vector<32x1xf32> to vector<32x256xf32>
    %6 = vector.broadcast %4 : vector<1x256xf32> to vector<32x256xf32>
    %7 = arith.mulf %5, %6 : vector<32x256xf32>
    %8 = vector.broadcast %1 : vector<32x1xf32> to vector<32x256xf32>
    %9 = arith.addf %7, %8 : vector<32x256xf32>
    %10 = math.tanh %9 : vector<32x256xf32>
    %c0_9 = arith.constant 0 : index
    %c0_10 = arith.constant 0 : index
    %c0_11 = arith.constant 0 : index
    %11 = vector.load %arg4[%c0_9, %c0_10, %c0_11] : memref<2x32x32xf32, #tpu.memory_space<vmem>>, vector<1x32x32xf32>
    %12 = vector.shape_cast %11 : vector<1x32x32xf32> to vector<32x32xf32>
    %cst = arith.constant dense<0.000000e+00> : vector<32x256xf32>
    %13 = tpu.matmul %12, %10, %cst {dimension_numbers = #tpu.dot_dimension_numbers<[1], [0], [0], [1], [0, 0, 1, 1], [], []>} : vector<32x32xf32>, vector<32x256xf32>, vector<32x256xf32> -> vector<32x256xf32>
    %c0_12 = arith.constant 0 : index
    %c0_13 = arith.constant 0 : index
    %c0_14 = arith.constant 0 : index
    %14 = vector.load %arg5[%c0_12, %c0_13, %c0_14] : memref<2x32x1xf32, #tpu.memory_space<vmem>>, vector<1x32x1xf32>
    %15 = vector.shape_cast %14 : vector<1x32x1xf32> to vector<32x1xf32>
    %16 = vector.broadcast %15 : vector<32x1xf32> to vector<32x256xf32>
    %17 = arith.addf %13, %16 : vector<32x256xf32>
    %18 = math.tanh %17 : vector<32x256xf32>
    %c1 = arith.constant 1 : index
    %c0_15 = arith.constant 0 : index
    %c0_16 = arith.constant 0 : index
    %19 = vector.load %arg4[%c1, %c0_15, %c0_16] : memref<2x32x32xf32, #tpu.memory_space<vmem>>, vector<1x32x32xf32>
    %20 = vector.shape_cast %19 : vector<1x32x32xf32> to vector<32x32xf32>
    %cst_17 = arith.constant dense<0.000000e+00> : vector<32x256xf32>
    %21 = tpu.matmul %20, %18, %cst_17 {dimension_numbers = #tpu.dot_dimension_numbers<[1], [0], [0], [1], [0, 0, 1, 1], [], []>} : vector<32x32xf32>, vector<32x256xf32>, vector<32x256xf32> -> vector<32x256xf32>
    %c1_18 = arith.constant 1 : index
    %c0_19 = arith.constant 0 : index
    %c0_20 = arith.constant 0 : index
    %22 = vector.load %arg5[%c1_18, %c0_19, %c0_20] : memref<2x32x1xf32, #tpu.memory_space<vmem>>, vector<1x32x1xf32>
    %23 = vector.shape_cast %22 : vector<1x32x1xf32> to vector<32x1xf32>
    %24 = vector.broadcast %23 : vector<32x1xf32> to vector<32x256xf32>
    %25 = arith.addf %21, %24 : vector<32x256xf32>
    %26 = math.tanh %25 : vector<32x256xf32>
    %27 = vector.broadcast %2 : vector<32x1xf32> to vector<32x256xf32>
    %28 = arith.mulf %27, %26 : vector<32x256xf32>
    %cst_21 = arith.constant dense<0.000000e+00> : vector<256xf32>
    %29 = vector.multi_reduction <add>, %28, %cst_21 [0] : vector<32x256xf32> to vector<256xf32>
    %30 = vector.shape_cast %29 : vector<256xf32> to vector<1x256xf32>
    %31 = vector.broadcast %3 : vector<1x1xf32> to vector<1x256xf32>
    %32 = arith.addf %30, %31 : vector<1x256xf32>
    %c0_22 = arith.constant 0 : index
    %c0_23 = arith.constant 0 : index
    %33 = vector.load %arg8[%c0_22, %c0_23] : memref<1x256xf32, #tpu.memory_space<vmem>>, vector<1x256xf32>
    tpu.vector_store %arg8[%c0_22, %c0_23], %32 {strides = array<i32>} : memref<1x256xf32, #tpu.memory_space<vmem>>, vector<1x256xf32>,
    return
  }
  func.func @transform_0(%arg0: i32) -> (i32, i32) {
    %c0_i32 = arith.constant 0 : i32
    %c0_i32_0 = arith.constant 0 : i32
    return %c0_i32, %arg0 : i32, i32
  }
  func.func @transform_1(%arg0: i32) -> (i32, i32) {
    %c0_i32 = arith.constant 0 : i32
    %c0_i32_0 = arith.constant 0 : i32
    %c0_i32_1 = arith.constant 0 : i32
    return %c0_i32, %c0_i32_0 : i32, i32
  }
  func.func @transform_2(%arg0: i32) -> (i32, i32) {
    %c0_i32 = arith.constant 0 : i32
    %c0_i32_0 = arith.constant 0 : i32
    %c0_i32_1 = arith.constant 0 : i32
    return %c0_i32, %c0_i32_0 : i32, i32
  }
  func.func @transform_3(%arg0: i32) -> (i32, i32, i32) {
    %c0_i32 = arith.constant 0 : i32
    %c0_i32_0 = arith.constant 0 : i32
    %c0_i32_1 = arith.constant 0 : i32
    %c0_i32_2 = arith.constant 0 : i32
    return %c0_i32, %c0_i32_0, %c0_i32_1 : i32, i32, i32
  }
  func.func @transform_4(%arg0: i32) -> (i32, i32, i32) {
    %c0_i32 = arith.constant 0 : i32
    %c0_i32_0 = arith.constant 0 : i32
    %c0_i32_1 = arith.constant 0 : i32
    %c0_i32_2 = arith.constant 0 : i32
    return %c0_i32, %c0_i32_0, %c0_i32_1 : i32, i32, i32
  }
  func.func @transform_5(%arg0: i32) -> (i32, i32) {
    %c0_i32 = arith.constant 0 : i32
    %c0_i32_0 = arith.constant 0 : i32
    %c0_i32_1 = arith.constant 0 : i32
    return %c0_i32, %c0_i32_0 : i32, i32
  }
  func.func @transform_6(%arg0: i32) -> (i32, i32) {
    %c0_i32 = arith.constant 0 : i32
    %c0_i32_0 = arith.constant 0 : i32
    %c0_i32_1 = arith.constant 0 : i32
    return %c0_i32, %c0_i32_0 : i32, i32
  }
  func.func @transform_7(%arg0: i32) -> (i32, i32) {
    %c0_i32 = arith.constant 0 : i32
    %c0_i32_0 = arith.constant 0 : i32
    return %c0_i32, %arg0 : i32, i32
  }
}

</mosaic_0001>

<llo_original>
// kernel: tpu_custom_call.1
$region0: #{tpu_custom_call.1}
  #allocation0 [shape = 'u32[]', space=smem, size = 0x4, offset = 0x4, fixed_abs, tag = 'smem constant byte address 0x4 - core index']
  #allocation1 [shape = 'u32[144,128]{1,0:T(1,128)}', space=vmem, size = 0x12000, scoped, tag = 'internal scratch']
  #allocation2 [shape = 'f32[1,1]{1,0:T(1,128)S(1)}', space=vmem, size = 0x200, scoped, tag = 'scoped memory for tpu_custom_call.1']
  %s0 = inlined_call_operand.vmem [shape: f32[1,256], index: 0, kind: input, shape index: {}]
  %s1 = inlined_call_operand.vmem [shape: f32[32,1], index: 1, kind: input, shape index: {}]
  %s2 = inlined_call_operand.vmem [shape: f32[32,1], index: 2, kind: input, shape index: {}]
  %s3 = inlined_call_operand.vmem [shape: f32[2,32,32], index: 3, kind: input, shape index: {}]
  %s4 = inlined_call_operand.vmem [shape: f32[2,32,1], index: 4, kind: input, shape index: {}]
  %s5 = inlined_call_operand.vmem [shape: f32[32,1], index: 5, kind: input, shape index: {}]
  %s6 = inlined_call_operand.<no memory space> [shape: f32[1,1], index: 6, kind: input, shape index: {}]
  %s7 = inlined_call_operand.hbm [shape: f32[1,256], index: 7, kind: output, shape index: {}]
  %s8 = sld [smem:[#allocation0]]
  $region38: #{tpu_custom_call.1} parent=0
    _
  %s10 = ssub.s32 1, %s8
  %s11 = scalar_select 0, %s10, %s8
  %v12 = vstv %s6
  %13 = vst [vmem:[#allocation2] sm:$0x1] %v12
  $region1: #{tpu_custom_call.1} parent=0
    #allocation3 [shape = 'u8[1024]{0}', space=vmem, size = 0x400, scoped, tag = 'output window, operand 0, single buffered']
    #allocation4 [shape = 's32[1]{0}', space=sflag, size = 0x4, scoped, tag = 'scoped memory for tpu_custom_call.1']
    %14 = vsyncpa [#allocation4], 0
    // Predicated region
    $region2: #{tpu_custom_call.1} parent=1 // pred_check
      _
    $region3: #{tpu_custom_call.1} parent=1 // pred_check_branch
      %16 = sbr.rel (0) target = $region5
    $region4: #{tpu_custom_call.1} parent=1 // pred_region
      _
    $region5: #{tpu_custom_call.1} parent=1 // pred_fallthru
      _
    // Predicated region
    $region6: #{tpu_custom_call.1} parent=1 // pred_check
      _
    $region7: #{tpu_custom_call.1} parent=1 // pred_check_branch
      %18 = sbr.rel (0) target = $region9
    $region8: #{tpu_custom_call.1} parent=1 // pred_region
      _
    $region9: #{tpu_custom_call.1} parent=1 // pred_fallthru
      _
    // Predicated region
    $region10: #{tpu_custom_call.1} parent=1 // pred_check
      _
    $region11: #{tpu_custom_call.1} parent=1 // pred_check_branch
      %20 = sbr.rel (0) target = $region13
    $region12: #{tpu_custom_call.1} parent=1 // pred_region
      _
    $region13: #{tpu_custom_call.1} parent=1 // pred_fallthru
      _
    // Predicated region
    $region14: #{tpu_custom_call.1} parent=1 // pred_check
      _
    $region15: #{tpu_custom_call.1} parent=1 // pred_check_branch
      %22 = sbr.rel (0) target = $region17
    $region16: #{tpu_custom_call.1} parent=1 // pred_region
      _
    $region17: #{tpu_custom_call.1} parent=1 // pred_fallthru
      _
    // Predicated region
    $region18: #{tpu_custom_call.1} parent=1 // pred_check
      _
    $region19: #{tpu_custom_call.1} parent=1 // pred_check_branch
      %24 = sbr.rel (0) target = $region21
    $region20: #{tpu_custom_call.1} parent=1 // pred_region
      _
    $region21: #{tpu_custom_call.1} parent=1 // pred_fallthru
      _
    // Predicated region
    $region22: #{tpu_custom_call.1} parent=1 // pred_check
      _
    $region23: #{tpu_custom_call.1} parent=1 // pred_check_branch
      %26 = sbr.rel (0) target = $region25
    $region24: #{tpu_custom_call.1} parent=1 // pred_region
      _
    $region25: #{tpu_custom_call.1} parent=1 // pred_fallthru
      _
    // Predicated region
    $region26: #{tpu_custom_call.1} parent=1 // pred_check
      _
    $region27: #{tpu_custom_call.1} parent=1 // pred_check_branch
      %28 = sbr.rel (0) target = $region29
    $region28: #{tpu_custom_call.1} parent=1 // pred_region
      _
    $region29: #{tpu_custom_call.1} parent=1 // pred_fallthru
      _
    %v29 = vld [vmem:[%s1] sm:$0xff]
    %v30 = vld [vmem:[%s1 + $0x8] sm:$0xff]
    %v31 = vld [vmem:[%s1 + $0x10] sm:$0xff]
    %v32 = vld [vmem:[%s1 + $0x18] sm:$0xff]
    %v33 = vld [vmem:[%s2] sm:$0xff]
    %v34 = vld [vmem:[%s2 + $0x8] sm:$0xff]
    %v35 = vld [vmem:[%s2 + $0x10] sm:$0xff]
    %v36 = vld [vmem:[%s2 + $0x18] sm:$0xff]
    %v37 = vld [vmem:[%s5] sm:$0xff]
    %v38 = vld [vmem:[%s5 + $0x8] sm:$0xff]
    %v39 = vld [vmem:[%s5 + $0x10] sm:$0xff]
    %v40 = vld [vmem:[%s5 + $0x18] sm:$0xff]
    %v41 = vld [vmem:[#allocation2] sm:$0x1]
    %v42 = vld [vmem:[%s0] sm:$0x3]
    %44 = vset.pattern.permute.xlu0 0
    %45 = vperm.xlu0 %44, %v29
    %v46 = vpop.permute.xlu0 %45
    %49 = vset.pattern.permute.xlu0 0
    %50 = vperm.xlu0 %49, %v30
    %v51 = vpop.permute.xlu0 %50
    %54 = vset.pattern.permute.xlu0 0
    %55 = vperm.xlu0 %54, %v31
    %v56 = vpop.permute.xlu0 %55
    %59 = vset.pattern.permute.xlu0 0
    %60 = vperm.xlu0 %59, %v32
    %v61 = vpop.permute.xlu0 %60
    %v64 = vlaneseq
    %v65 = vshrl.u32 %v64, 7
    %v66 = vsub.s32 0, %v65
    %v67 = vrot.slane %v42, %v66
    %v68 = vlaneseq
    %v69 = vshrl.u32 %v68, 7
    %v70 = vsub.s32 1, %v69
    %v71 = vrot.slane %v42, %v70
    %v74 = vmul.f32 %v46, %v67
    %v75 = vmul.f32 %v46, %v71
    %v76 = vmul.f32 %v51, %v67
    %v77 = vmul.f32 %v51, %v71
    %v78 = vmul.f32 %v56, %v67
    %v79 = vmul.f32 %v56, %v71
    %v80 = vmul.f32 %v61, %v67
    %v81 = vmul.f32 %v61, %v71
    %83 = vset.pattern.permute.xlu0 0
    %84 = vperm.xlu0 %83, %v33
    %v85 = vpop.permute.xlu0 %84
    %88 = vset.pattern.permute.xlu0 0
    %89 = vperm.xlu0 %88, %v34
    %v90 = vpop.permute.xlu0 %89
    %93 = vset.pattern.permute.xlu0 0
    %94 = vperm.xlu0 %93, %v35
    %v95 = vpop.permute.xlu0 %94
    %98 = vset.pattern.permute.xlu0 0
    %99 = vperm.xlu0 %98, %v36
    %v100 = vpop.permute.xlu0 %99
    %v102 = vadd.f32 %v74, %v85
    %v103 = vadd.f32 %v75, %v85
    %v104 = vadd.f32 %v76, %v90
    %v105 = vadd.f32 %v77, %v90
    %v106 = vadd.f32 %v78, %v95
    %v107 = vadd.f32 %v79, %v95
    %v108 = vadd.f32 %v80, %v100
    %v109 = vadd.f32 %v81, %v100
    %v110 = vtanh.pop %v102
    %v111 = vtanh.pop %v103
    %v112 = vtanh.pop %v104
    %v113 = vtanh.pop %v105
    %v114 = vtanh.pop %v106
    %v115 = vtanh.pop %v107
    %v116 = vtanh.pop %v108
    %v117 = vtanh.pop %v109
    %v118 = vld [vmem:[%s3] sm:$0xff]
    %v119 = vld [vmem:[%s3 + $0x8] sm:$0xff]
    %v120 = vld [vmem:[%s3 + $0x10] sm:$0xff]
    %v121 = vld [vmem:[%s3 + $0x18] sm:$0xff]
    %v122 = vld [vmem:[%s4] sm:$0xff]
    %v123 = vld [vmem:[%s4 + $0x8] sm:$0xff]
    %v124 = vld [vmem:[%s4 + $0x10] sm:$0xff]
    %v125 = vld [vmem:[%s4 + $0x18] sm:$0xff]
    %127 = vset.pattern.permute.xlu0 0
    %128 = vperm.xlu0 %127, %v122
    %v129 = vpop.permute.xlu0 %128
    %132 = vset.pattern.permute.xlu0 0
    %133 = vperm.xlu0 %132, %v123
    %v134 = vpop.permute.xlu0 %133
    %137 = vset.pattern.permute.xlu0 0
    %138 = vperm.xlu0 %137, %v124
    %v139 = vpop.permute.xlu0 %138
    %142 = vset.pattern.permute.xlu0 0
    %143 = vperm.xlu0 %142, %v125
    %v144 = vpop.permute.xlu0 %143
    %vm146 = vcmask 261120
    %v148 = vsel %vm146, %v118, 0
    %v151 = vsel %vm146, %v119, 0
    %v154 = vsel %vm146, %v120, 0
    %v157 = vsel %vm146, %v121, 0
    %159 = vmatprep.subr.mxu0 0.0
    %160 = vmatpush1.msra.mxu0 0.0
    %161 = vmatprep.subr.mxu0 0.0
    %162 = vmatpush1.msra.mxu0 0.0
    %163 = vmatprep.subr.mxu0 0.0
    %164 = vmatpush1.msra.mxu0 0.0
    %165 = vmatprep.subr.mxu0 0.0
    %166 = vmatpush1.msra.mxu0 0.0
    %167 = vmatprep.subr.mxu0 0.0
    %168 = vmatpush1.msra.mxu0 0.0
    %169 = vmatprep.subr.mxu0 0.0
    %170 = vmatpush1.msra.mxu0 0.0
    %171 = vmatprep.subr.mxu0 0.0
    %172 = vmatpush1.msra.mxu0 0.0
    %173 = vmatprep.subr.mxu0 0.0
    %174 = vmatpush1.msra.mxu0 0.0
    %175 = vmatprep.subr.mxu0 0.0
    %176 = vmatpush1.msra.mxu0 0.0
    %177 = vmatprep.subr.mxu0 0.0
    %178 = vmatpush1.msra.mxu0 0.0
    %179 = vmatprep.subr.mxu0 0.0
    %180 = vmatpush1.msra.mxu0 0.0
    %181 = vmatprep.subr.mxu0 0.0
    %182 = vmatpush1.msra.mxu0 0.0
    %183 = vmatprep.subr.mxu0 %v117
    %184 = vmatpush1.msra.mxu0 %v116
    %185 = vmatprep.subr.mxu0 %v115
    %186 = vmatpush1.msra.mxu0 %v114
    %187 = vmatprep.subr.mxu0 %v113
    %188 = vmatpush1.msra.mxu0 %v112
    %189 = vmatprep.subr.mxu0 %v111
    %190 = vmatpush1.msra.mxu0 %v110
    %191 = vmatprep.subr.mxu0 0.0
    %192 = vmatpush2.msra.mxu0 0.0
    %193 = vmatprep.subr.mxu0 0.0
    %194 = vmatpush2.msra.mxu0 0.0
    %195 = vmatprep.subr.mxu0 0.0
    %196 = vmatpush2.msra.mxu0 0.0
    %197 = vmatprep.subr.mxu0 0.0
    %198 = vmatpush2.msra.mxu0 0.0
    %199 = vmatprep.subr.mxu0 0.0
    %200 = vmatpush2.msra.mxu0 0.0
    %201 = vmatprep.subr.mxu0 0.0
    %202 = vmatpush2.msra.mxu0 0.0
    %203 = vmatprep.subr.mxu0 0.0
    %204 = vmatpush2.msra.mxu0 0.0
    %205 = vmatprep.subr.mxu0 0.0
    %206 = vmatpush2.msra.mxu0 0.0
    %207 = vmatprep.subr.mxu0 0.0
    %208 = vmatpush2.msra.mxu0 0.0
    %209 = vmatprep.subr.mxu0 0.0
    %210 = vmatpush2.msra.mxu0 0.0
    %211 = vmatprep.subr.mxu0 0.0
    %212 = vmatpush2.msra.mxu0 0.0
    %213 = vmatprep.subr.mxu0 0.0
    %214 = vmatpush2.msra.mxu0 0.0
    %215 = vmatprep.subr.mxu0 0.0
    %216 = vmatpush2.msra.mxu0 0.0
    %217 = vmatprep.subr.mxu0 0.0
    %218 = vmatpush2.msra.mxu0 0.0
    %219 = vmatprep.subr.mxu0 0.0
    %220 = vmatpush2.msra.mxu0 0.0
    %221 = vmatprep.subr.mxu0 0.0
    %222 = vmatpush2.msra.mxu0 0.0
    %223 = vmatprep.mubr.f32.mxu0 0.0
    %224 = vmatmul.mubr.f32.gmra.mxu0 %v148
    %v225 = vpop.f32.mrf.mxu0
    %v226 = vadd.f32 %v129, %v225
    %v227 = vpop.f32.mrf.mxu0
    %v228 = vadd.f32 %v129, %v227
    %229 = vmatprep.mubr.f32.mxu0 0.0
    %230 = vmatmul.mubr.f32.gmra.mxu0 %v151
    %v231 = vpop.f32.mrf.mxu0
    %v232 = vadd.f32 %v134, %v231
    %v233 = vpop.f32.mrf.mxu0
    %v234 = vadd.f32 %v134, %v233
    %235 = vmatprep.mubr.f32.mxu0 0.0
    %236 = vmatmul.mubr.f32.gmra.mxu0 %v154
    %v237 = vpop.f32.mrf.mxu0
    %v238 = vadd.f32 %v139, %v237
    %v239 = vpop.f32.mrf.mxu0
    %v240 = vadd.f32 %v139, %v239
    %241 = vmatprep.mubr.f32.mxu0 0.0
    %242 = vmatmul.mubr.f32.gmra.mxu0 %v157
    %v243 = vpop.f32.mrf.mxu0
    %v244 = vadd.f32 %v144, %v243
    %v245 = vpop.f32.mrf.mxu0
    %v246 = vadd.f32 %v144, %v245
    %247 = vdwg.mxu0
    %v248 = vtanh.pop %v226
    %v249 = vtanh.pop %v228
    %v250 = vtanh.pop %v232
    %v251 = vtanh.pop %v234
    %v252 = vtanh.pop %v238
    %v253 = vtanh.pop %v240
    %v254 = vtanh.pop %v244
    %v255 = vtanh.pop %v246
    %s256 = scalar_lea.vmem %s3, 32
    %v257 = vld [vmem:[%s256] sm:$0xff]
    %v258 = vld [vmem:[%s256 + $0x8] sm:$0xff]
    %v259 = vld [vmem:[%s256 + $0x10] sm:$0xff]
    %v260 = vld [vmem:[%s256 + $0x18] sm:$0xff]
    %s261 = scalar_lea.vmem %s4, 32
    %v262 = vld [vmem:[%s261] sm:$0xff]
    %v263 = vld [vmem:[%s261 + $0x8] sm:$0xff]
    %v264 = vld [vmem:[%s261 + $0x10] sm:$0xff]
    %v265 = vld [vmem:[%s261 + $0x18] sm:$0xff]
    %267 = vset.pattern.permute.xlu0 0
    %268 = vperm.xlu0 %267, %v262
    %v269 = vpop.permute.xlu0 %268
    %272 = vset.pattern.permute.xlu0 0
    %273 = vperm.xlu0 %272, %v263
    %v274 = vpop.permute.xlu0 %273
    %277 = vset.pattern.permute.xlu0 0
    %278 = vperm.xlu0 %277, %v264
    %v279 = vpop.permute.xlu0 %278
    %282 = vset.pattern.permute.xlu0 0
    %283 = vperm.xlu0 %282, %v265
    %v284 = vpop.permute.xlu0 %283
    %v287 = vsel %vm146, %v257, 0
    %v290 = vsel %vm146, %v258, 0
    %v293 = vsel %vm146, %v259, 0
    %v296 = vsel %vm146, %v260, 0
    %298 = vmatprep.subr.mxu0 0.0
    %299 = vmatpush1.msra.mxu0 0.0
    %300 = vmatprep.subr.mxu0 0.0
    %301 = vmatpush1.msra.mxu0 0.0
    %302 = vmatprep.subr.mxu0 0.0
    %303 = vmatpush1.msra.mxu0 0.0
    %304 = vmatprep.subr.mxu0 0.0
    %305 = vmatpush1.msra.mxu0 0.0
    %306 = vmatprep.subr.mxu0 0.0
    %307 = vmatpush1.msra.mxu0 0.0
    %308 = vmatprep.subr.mxu0 0.0
    %309 = vmatpush1.msra.mxu0 0.0
    %310 = vmatprep.subr.mxu0 0.0
    %311 = vmatpush1.msra.mxu0 0.0
    %312 = vmatprep.subr.mxu0 0.0
    %313 = vmatpush1.msra.mxu0 0.0
    %314 = vmatprep.subr.mxu0 0.0
    %315 = vmatpush1.msra.mxu0 0.0
    %316 = vmatprep.subr.mxu0 0.0
    %317 = vmatpush1.msra.mxu0 0.0
    %318 = vmatprep.subr.mxu0 0.0
    %319 = vmatpush1.msra.mxu0 0.0
    %320 = vmatprep.subr.mxu0 0.0
    %321 = vmatpush1.msra.mxu0 0.0
    %322 = vmatprep.subr.mxu0 %v255
    %323 = vmatpush1.msra.mxu0 %v254
    %324 = vmatprep.subr.mxu0 %v253
    %325 = vmatpush1.msra.mxu0 %v252
    %326 = vmatprep.subr.mxu0 %v251
    %327 = vmatpush1.msra.mxu0 %v250
    %328 = vmatprep.subr.mxu0 %v249
    %329 = vmatpush1.msra.mxu0 %v248
    %330 = vmatprep.subr.mxu0 0.0
    %331 = vmatpush2.msra.mxu0 0.0
    %332 = vmatprep.subr.mxu0 0.0
    %333 = vmatpush2.msra.mxu0 0.0
    %334 = vmatprep.subr.mxu0 0.0
    %335 = vmatpush2.msra.mxu0 0.0
    %336 = vmatprep.subr.mxu0 0.0
    %337 = vmatpush2.msra.mxu0 0.0
    %338 = vmatprep.subr.mxu0 0.0
    %339 = vmatpush2.msra.mxu0 0.0
    %340 = vmatprep.subr.mxu0 0.0
    %341 = vmatpush2.msra.mxu0 0.0
    %342 = vmatprep.subr.mxu0 0.0
    %343 = vmatpush2.msra.mxu0 0.0
    %344 = vmatprep.subr.mxu0 0.0
    %345 = vmatpush2.msra.mxu0 0.0
    %346 = vmatprep.subr.mxu0 0.0
    %347 = vmatpush2.msra.mxu0 0.0
    %348 = vmatprep.subr.mxu0 0.0
    %349 = vmatpush2.msra.mxu0 0.0
    %350 = vmatprep.subr.mxu0 0.0
    %351 = vmatpush2.msra.mxu0 0.0
    %352 = vmatprep.subr.mxu0 0.0
    %353 = vmatpush2.msra.mxu0 0.0
    %354 = vmatprep.subr.mxu0 0.0
    %355 = vmatpush2.msra.mxu0 0.0
    %356 = vmatprep.subr.mxu0 0.0
    %357 = vmatpush2.msra.mxu0 0.0
    %358 = vmatprep.subr.mxu0 0.0
    %359 = vmatpush2.msra.mxu0 0.0
    %360 = vmatprep.subr.mxu0 0.0
    %361 = vmatpush2.msra.mxu0 0.0
    %362 = vmatprep.mubr.f32.mxu0 0.0
    %363 = vmatmul.mubr.f32.gmra.mxu0 %v287
    %v364 = vpop.f32.mrf.mxu0
    %v365 = vadd.f32 %v269, %v364
    %v366 = vpop.f32.mrf.mxu0
    %v367 = vadd.f32 %v269, %v366
    %368 = vmatprep.mubr.f32.mxu0 0.0
    %369 = vmatmul.mubr.f32.gmra.mxu0 %v290
    %v370 = vpop.f32.mrf.mxu0
    %v371 = vadd.f32 %v274, %v370
    %v372 = vpop.f32.mrf.mxu0
    %v373 = vadd.f32 %v274, %v372
    %374 = vmatprep.mubr.f32.mxu0 0.0
    %375 = vmatmul.mubr.f32.gmra.mxu0 %v293
    %v376 = vpop.f32.mrf.mxu0
    %v377 = vadd.f32 %v279, %v376
    %v378 = vpop.f32.mrf.mxu0
    %v379 = vadd.f32 %v279, %v378
    %380 = vmatprep.mubr.f32.mxu0 0.0
    %381 = vmatmul.mubr.f32.gmra.mxu0 %v296
    %v382 = vpop.f32.mrf.mxu0
    %v383 = vadd.f32 %v284, %v382
    %v384 = vpop.f32.mrf.mxu0
    %v385 = vadd.f32 %v284, %v384
    %386 = vdwg.mxu0
    %v387 = vtanh.pop %v365
    %v388 = vtanh.pop %v367
    %v389 = vtanh.pop %v371
    %v390 = vtanh.pop %v373
    %v391 = vtanh.pop %v377
    %v392 = vtanh.pop %v379
    %v393 = vtanh.pop %v383
    %v394 = vtanh.pop %v385
    %396 = vset.pattern.permute.xlu0 0
    %397 = vperm.xlu0 %396, %v37
    %v398 = vpop.permute.xlu0 %397
    %401 = vset.pattern.permute.xlu0 0
    %402 = vperm.xlu0 %401, %v38
    %v403 = vpop.permute.xlu0 %402
    %406 = vset.pattern.permute.xlu0 0
    %407 = vperm.xlu0 %406, %v39
    %v408 = vpop.permute.xlu0 %407
    %411 = vset.pattern.permute.xlu0 0
    %412 = vperm.xlu0 %411, %v40
    %v413 = vpop.permute.xlu0 %412
    %v415 = vmul.f32 %v398, %v387
    %v416 = vmul.f32 %v398, %v388
    %v417 = vmul.f32 %v403, %v389
    %v418 = vmul.f32 %v403, %v390
    %v419 = vmul.f32 %v408, %v391
    %v420 = vmul.f32 %v408, %v392
    %v421 = vmul.f32 %v413, %v393
    %v422 = vmul.f32 %v413, %v394
    %v423 = vadd.f32 %v415, %v417
    %v424 = vadd.f32 %v423, %v419
    %v425 = vadd.f32 %v424, %v421
    %v426 = vrot.slane %v425, 4
    %v427 = vadd.f32 %v425, %v426
    %v428 = vrot.slane %v427, 2
    %v429 = vadd.f32 %v427, %v428
    %v430 = vrot.slane %v429, 1
    %v431 = vadd.f32 %v429, %v430
    %v432 = vadd.f32 %v416, %v418
    %v433 = vadd.f32 %v432, %v420
    %v434 = vadd.f32 %v433, %v422
    %v435 = vrot.slane %v434, 4
    %v436 = vadd.f32 %v434, %v435
    %v437 = vrot.slane %v436, 2
    %v438 = vadd.f32 %v436, %v437
    %v439 = vrot.slane %v438, 1
    %v440 = vadd.f32 %v438, %v439
    %442 = vset.pattern.permute.xlu0 0
    %443 = vperm.xlu0 %442, %v41
    %v444 = vpop.permute.xlu0 %443
    %v446 = vlaneseq
    %v447 = vshrl.u32 %v446, 7
    %v448 = vsub.s32 0, %v447
    %v449 = vrot.slane %v444, %v448
    %v450 = vadd.f32 %v431, %v449
    %v451 = vadd.f32 %v440, %v449
    %v454 = vcombine.low %v450, %v451
    %v456 = vunpack.c.l.s4 1966171168
    %v457 = vunpack.c.0.s8 %v456
    %v458 = vlaneseq
    %v459 = vshrl.u32 %v458, 7
    %v460 = vsub.s32 %v457, %v459
    %v461 = vrot.slane %v454, %v460
    %v463 = vunpack.c.l.s4 1966171168
    %v464 = vunpack.c.0.s8 %v463
    %v465 = vlaneseq
    %v466 = vshrl.u32 %v465, 7
    %v467 = vsub.s32 %v464, %v466
    %v468 = vrot.slane %v461, %v467
    %v470 = vlaneseq
    %vm471 = vcmp.ge.s32.totalorder %v470, 0
    %vm472 = vcmp.lt.s32.totalorder %v470, 256
    %vm473 = vmand %vm471, %vm472
    %474 = vst.msk [vmem:[#allocation3] sm:$0x3] %vm473, %v468
    // Predicated region
    $region30: #{tpu_custom_call.1} parent=1 // pred_check
      _
    $region31: #{tpu_custom_call.1} parent=1 // pred_check_branch
      %476 = sbr.rel (0) target = $region33
    $region32: #{tpu_custom_call.1} parent=1 // pred_region
      %s478 = ssub.s32 32, 32
      %479 = vsyncadd [#allocation4], %s478
      %s481 = sshll.u32 [#allocation3], 4
      %s482 = int_to_ptr.vmem [resolvable:$true] %s481
      %484 = dma.vmem_to_hbm [thread:$0]  %s482, 32, %s7, [#allocation4]
    $region33: #{tpu_custom_call.1} parent=1 // pred_fallthru
      _
    // Predicated region
    $region34: #{tpu_custom_call.1} parent=1 // pred_check
      _
    $region35: #{tpu_custom_call.1} parent=1 // pred_check_branch
      %486 = sbr.rel (0) target = $region37
    $region36: #{tpu_custom_call.1} parent=1 // pred_region
      %487 = dma.done [#allocation4], 32
    $region37: #{tpu_custom_call.1} parent=1 // pred_fallthru
      _
    %488 = vsyncpa [#allocation4], 1

</llo_original>
